<compile_context>
chip_gen: v5e
topology: v5e:2x2
jax: 0.10.0
libtpu: 0.0.40
codegen_flags: <defaults>
</compile_context>

<pallas_src>
import functools
import math

import jax
import jax.numpy as jnp
from jax.experimental import pallas as pl
from jax.experimental.pallas import tpu as pltpu

IN_DIM = 100
OUT_DIM = 100
HID = 64


def _round_up(x, m):
    return ((x + m - 1) // m) * m


def _injector_kernel(x_ref,
                     w1_ref, b1_ref,
                     wh_ref, bh_ref,
                     w5_ref, b5_ref,
                     o_ref,
                     *, compute_dtype):
    """Whole 5-layer MLP fused in one kernel (one batch tile per grid step).

    x_ref : (tile, 100) f32   -- cast to bf16 in-kernel (no wrapper pad/cast pass)
    w1_ref: (100, 64)   bf16
    wh_ref: (3, 64, 64) bf16  -- hidden layers 2..4 stacked
    w5_ref: (64, 100)   bf16
    b*_ref: f32 biases
    o_ref : (tile, 100) f32   -- unpadded store (no wrapper slice pass)
    """
    f32 = jnp.float32

    # Layer 1: Linear(100 -> 64) + ReLU.  Dropout(0.2) = identity in eval mode.
    x = x_ref[...].astype(compute_dtype)
    h = jnp.dot(x, w1_ref[...], preferred_element_type=f32) + b1_ref[...]
    h = jnp.maximum(h, 0.0)

    # Layers 2-4: Linear(64 -> 64) + ReLU, weights statically indexed from stack.
    for l in range(3):
        h = jnp.dot(h.astype(compute_dtype), wh_ref[l],
                    preferred_element_type=f32) + bh_ref[l]
        h = jnp.maximum(h, 0.0)

    # Layer 5: Linear(64 -> 100), no activation.
    y = jnp.dot(h.astype(compute_dtype), w5_ref[...],
                preferred_element_type=f32) + b5_ref[...]

    o_ref[...] = y.astype(o_ref.dtype)


def injector_forward(ev, params, *, batch_tile=2048):
    """ev: (B, 100) float32.  params: dict from init_params."""
    B, in_dim = ev.shape
    assert in_dim == IN_DIM

    compute_dtype = params["w1"].dtype

    # Tile selection:
    #   * big tile (default 2048) -- grid-step overhead dominates small tiles,
    #   * capped at round_up(cdiv(B,2),128) so large batches get >= 2 grid
    #     steps (v7x has 2 TensorCores sharded over the "parallel" axis),
    #   * multiple of 16 (bf16 vreg holds (16,128) rows),
    #   * clamped to B for tiny batches (block == full array is always legal).
    tile = min(batch_tile, _round_up(pl.cdiv(B, 2), 128))
    tile = max(16, _round_up(tile, 16))
    if tile >= B:
        tile = B
    grid = (pl.cdiv(B, tile),)

    def full_spec(shape):
        n = len(shape)
        return pl.BlockSpec(shape, lambda i, n=n: (0,) * n)

    in_specs = [
        pl.BlockSpec((tile, IN_DIM), lambda i: (i, 0)),     # x tile (full 100 lanes)
        full_spec((IN_DIM, HID)),  full_spec((1, HID)),     # w1, b1
        full_spec((3, HID, HID)),  full_spec((3, 1, HID)),  # wh, bh (layers 2-4)
        full_spec((HID, OUT_DIM)), full_spec((1, OUT_DIM)), # w5, b5
    ]
    out_spec = pl.BlockSpec((tile, OUT_DIM), lambda i: (i, 0))

    # Advisory cost estimate for XLA's scheduler.
    flops = 2 * B * (IN_DIM * HID + 3 * HID * HID + HID * OUT_DIM)
    weight_bytes = sum(int(p.size) * p.dtype.itemsize for p in params.values())
    bytes_accessed = (B * IN_DIM * 4        # x in (f32)
                      + B * OUT_DIM * 4     # y out (f32)
                      + weight_bytes)
    cost = pl.CostEstimate(flops=flops, transcendentals=0,
                           bytes_accessed=bytes_accessed)

    out = pl.pallas_call(
        functools.partial(_injector_kernel, compute_dtype=compute_dtype),
        out_shape=jax.ShapeDtypeStruct((B, OUT_DIM), jnp.float32),
        grid_spec=pltpu.PrefetchScalarGridSpec(
            num_scalar_prefetch=0,
            grid=grid,
            in_specs=in_specs,
            out_specs=out_spec,
        ),
        compiler_params=pltpu.CompilerParams(
            dimension_semantics=("parallel",)),
        cost_estimate=cost,
    )(ev,
      params["w1"], params["b1"],
      params["wh"], params["bh"],
      params["w5"], params["b5"])

    return out


def init_params(key, *, weight_dtype=jnp.bfloat16):
    """Kaiming-uniform-ish init (like nn.Linear defaults), stored transposed
    as (in, out); the three hidden layers are stacked into one (3,64,64)
    weight / (3,1,64) bias.  Weights bf16, biases f32."""
    dims = [(IN_DIM, HID), (HID, HID), (HID, HID), (HID, HID), (HID, OUT_DIM)]
    ws, bs = [], []
    for fan_in, fan_out in dims:
        key, kw, kb = jax.random.split(key, 3)
        bound = 1.0 / math.sqrt(fan_in)
        ws.append(jax.random.uniform(kw, (fan_in, fan_out), jnp.float32,
                                     -bound, bound))
        bs.append(jax.random.uniform(kb, (fan_out,), jnp.float32,
                                     -bound, bound))

    return {
        "w1": ws[0].astype(weight_dtype),                         # (100, 64)
        "b1": bs[0].reshape(1, HID),                              # f32
        "wh": jnp.stack(ws[1:4]).astype(weight_dtype),            # (3, 64, 64)
        "bh": jnp.stack([b.reshape(1, HID) for b in bs[1:4]]),    # (3, 1, 64) f32
        "w5": ws[4].astype(weight_dtype),                         # (64, 100)
        "b5": bs[4].reshape(1, OUT_DIM),                          # f32
    }


def reference_forward(ev, params):
    """Pure-JAX reference mirroring the kernel's bf16-matmul / f32-accumulate
    numerics (eval-mode dropout = identity)."""
    f32 = jnp.float32
    cdt = params["w1"].dtype
    x = ev.astype(cdt)
    h = jnp.maximum(
        jnp.dot(x, params["w1"], preferred_element_type=f32) + params["b1"], 0.0)
    for l in range(3):
        h = jnp.maximum(
            jnp.dot(h.astype(cdt), params["wh"][l],
                    preferred_element_type=f32) + params["bh"][l], 0.0)
    y = jnp.dot(h.astype(cdt), params["w5"],
                preferred_element_type=f32) + params["b5"]
    return y


if __name__ == "__main__":
    key = jax.random.PRNGKey(0)
    key, kx1, kx2 = jax.random.split(key, 3)
    params = init_params(key)

    # Small demo batch: single full block.
    B1 = 16
    ev1 = jax.random.normal(kx1, (B1, IN_DIM), jnp.float32)
    out1 = jax.block_until_ready(injector_forward(ev1, params))
    ref1 = reference_forward(ev1, params)
    assert out1.shape == (B1, OUT_DIM)
    assert jnp.allclose(out1, ref1, atol=2e-2, rtol=2e-2), \
        f"mismatch (max abs err {float(jnp.max(jnp.abs(out1 - ref1)))})"

    # Second check exercising the partial last block (grid of 2, 128 + 72 rows).
    B2 = 200
    ev2 = jax.random.normal(kx2, (B2, IN_DIM), jnp.float32)
    out2 = jax.block_until_ready(injector_forward(ev2, params, batch_tile=128))
    ref2 = reference_forward(ev2, params)
    assert out2.shape == (B2, OUT_DIM)
    assert jnp.allclose(out2, ref2, atol=2e-2, rtol=2e-2), \
        f"mismatch (max abs err {float(jnp.max(jnp.abs(out2 - ref2)))})"

    print("KERNEL_OK")
</pallas_src>

<mosaic_0001>
module attributes {stable_mosaic.version = 11 : i64} {
  func.func @_injector_kernel(%arg0: i32, %arg1: memref<16x100xf32, #tpu.memory_space<vmem>>, %arg2: memref<100x64xbf16, #tpu.memory_space<vmem>>, %arg3: memref<1x64xf32, #tpu.memory_space<vmem>>, %arg4: memref<3x64x64xbf16, #tpu.memory_space<vmem>>, %arg5: memref<3x1x64xf32, #tpu.memory_space<vmem>>, %arg6: memref<64x100xbf16, #tpu.memory_space<vmem>>, %arg7: memref<1x100xf32, #tpu.memory_space<vmem>>, %arg8: memref<16x100xf32, #tpu.memory_space<vmem>>) attributes {dimension_semantics = [#tpu.dimension_semantics<parallel>], iteration_bounds = array<i64: 1>, scalar_prefetch = 0 : i64, scratch_operands = 0 : i64, tpu.core_type = #tpu.core_type<tc>, window_params = [{transform_indices = @transform_0, window_bounds = array<i64: 16, 100>}, {pipeline_mode = #tpu.pipeline_mode<synchronous>, transform_indices = @transform_1, window_bounds = array<i64: 100, 64>}, {pipeline_mode = #tpu.pipeline_mode<synchronous>, transform_indices = @transform_2, window_bounds = array<i64: 1, 64>}, {pipeline_mode = #tpu.pipeline_mode<synchronous>, transform_indices = @transform_3, window_bounds = array<i64: 3, 64, 64>}, {pipeline_mode = #tpu.pipeline_mode<synchronous>, transform_indices = @transform_4, window_bounds = array<i64: 3, 1, 64>}, {pipeline_mode = #tpu.pipeline_mode<synchronous>, transform_indices = @transform_5, window_bounds = array<i64: 64, 100>}, {pipeline_mode = #tpu.pipeline_mode<synchronous>, transform_indices = @transform_6, window_bounds = array<i64: 1, 100>}, {transform_indices = @transform_7, window_bounds = array<i64: 16, 100>}]} {
    %c0 = arith.constant 0 : index
    %c0_0 = arith.constant 0 : index
    %0 = vector.load %arg1[%c0, %c0_0] : memref<16x100xf32, #tpu.memory_space<vmem>>, vector<16x100xf32>
    %1 = arith.truncf %0 : vector<16x100xf32> to vector<16x100xbf16>
    %c0_1 = arith.constant 0 : index
    %c0_2 = arith.constant 0 : index
    %2 = vector.load %arg2[%c0_1, %c0_2] : memref<100x64xbf16, #tpu.memory_space<vmem>>, vector<100x64xbf16>
    %cst = arith.constant dense<0.000000e+00> : vector<16x64xf32>
    %3 = tpu.matmul %1, %2, %cst {dimension_numbers = #tpu.dot_dimension_numbers<[1], [0], [0], [1], [0, 0, 1, 1], [], []>} : vector<16x100xbf16>, vector<100x64xbf16>, vector<16x64xf32> -> vector<16x64xf32>
    %c0_3 = arith.constant 0 : index
    %c0_4 = arith.constant 0 : index
    %4 = vector.load %arg3[%c0_3, %c0_4] : memref<1x64xf32, #tpu.memory_space<vmem>>, vector<1x64xf32>
    %5 = vector.broadcast %4 : vector<1x64xf32> to vector<16x64xf32>
    %6 = arith.addf %3, %5 : vector<16x64xf32>
    %cst_5 = arith.constant 0.000000e+00 : f32
    %7 = vector.broadcast %cst_5 : f32 to vector<16x64xf32>
    %8 = arith.maximumf %6, %7 : vector<16x64xf32>
    %9 = arith.truncf %8 : vector<16x64xf32> to vector<16x64xbf16>
    %c0_6 = arith.constant 0 : index
    %c0_7 = arith.constant 0 : index
    %c0_8 = arith.constant 0 : index
    %10 = vector.load %arg4[%c0_6, %c0_7, %c0_8] : memref<3x64x64xbf16, #tpu.memory_space<vmem>>, vector<1x64x64xbf16>
    %11 = vector.shape_cast %10 : vector<1x64x64xbf16> to vector<64x64xbf16>
    %cst_9 = arith.constant dense<0.000000e+00> : vector<16x64xf32>
    %12 = tpu.matmul %9, %11, %cst_9 {dimension_numbers = #tpu.dot_dimension_numbers<[1], [0], [0], [1], [0, 0, 1, 1], [], []>} : vector<16x64xbf16>, vector<64x64xbf16>, vector<16x64xf32> -> vector<16x64xf32>
    %c0_10 = arith.constant 0 : index
    %c0_11 = arith.constant 0 : index
    %c0_12 = arith.constant 0 : index
    %13 = vector.load %arg5[%c0_10, %c0_11, %c0_12] : memref<3x1x64xf32, #tpu.memory_space<vmem>>, vector<1x1x64xf32>
    %14 = vector.shape_cast %13 : vector<1x1x64xf32> to vector<1x64xf32>
    %15 = vector.broadcast %14 : vector<1x64xf32> to vector<16x64xf32>
    %16 = arith.addf %12, %15 : vector<16x64xf32>
    %cst_13 = arith.constant 0.000000e+00 : f32
    %17 = vector.broadcast %cst_13 : f32 to vector<16x64xf32>
    %18 = arith.maximumf %16, %17 : vector<16x64xf32>
    %19 = arith.truncf %18 : vector<16x64xf32> to vector<16x64xbf16>
    %c1 = arith.constant 1 : index
    %c0_14 = arith.constant 0 : index
    %c0_15 = arith.constant 0 : index
    %20 = vector.load %arg4[%c1, %c0_14, %c0_15] : memref<3x64x64xbf16, #tpu.memory_space<vmem>>, vector<1x64x64xbf16>
    %21 = vector.shape_cast %20 : vector<1x64x64xbf16> to vector<64x64xbf16>
    %cst_16 = arith.constant dense<0.000000e+00> : vector<16x64xf32>
    %22 = tpu.matmul %19, %21, %cst_16 {dimension_numbers = #tpu.dot_dimension_numbers<[1], [0], [0], [1], [0, 0, 1, 1], [], []>} : vector<16x64xbf16>, vector<64x64xbf16>, vector<16x64xf32> -> vector<16x64xf32>
    %c1_17 = arith.constant 1 : index
    %c0_18 = arith.constant 0 : index
    %c0_19 = arith.constant 0 : index
    %23 = vector.load %arg5[%c1_17, %c0_18, %c0_19] : memref<3x1x64xf32, #tpu.memory_space<vmem>>, vector<1x1x64xf32>
    %24 = vector.shape_cast %23 : vector<1x1x64xf32> to vector<1x64xf32>
    %25 = vector.broadcast %24 : vector<1x64xf32> to vector<16x64xf32>
    %26 = arith.addf %22, %25 : vector<16x64xf32>
    %cst_20 = arith.constant 0.000000e+00 : f32
    %27 = vector.broadcast %cst_20 : f32 to vector<16x64xf32>
    %28 = arith.maximumf %26, %27 : vector<16x64xf32>
    %29 = arith.truncf %28 : vector<16x64xf32> to vector<16x64xbf16>
    %c2 = arith.constant 2 : index
    %c0_21 = arith.constant 0 : index
    %c0_22 = arith.constant 0 : index
    %30 = vector.load %arg4[%c2, %c0_21, %c0_22] : memref<3x64x64xbf16, #tpu.memory_space<vmem>>, vector<1x64x64xbf16>
    %31 = vector.shape_cast %30 : vector<1x64x64xbf16> to vector<64x64xbf16>
    %cst_23 = arith.constant dense<0.000000e+00> : vector<16x64xf32>
    %32 = tpu.matmul %29, %31, %cst_23 {dimension_numbers = #tpu.dot_dimension_numbers<[1], [0], [0], [1], [0, 0, 1, 1], [], []>} : vector<16x64xbf16>, vector<64x64xbf16>, vector<16x64xf32> -> vector<16x64xf32>
    %c2_24 = arith.constant 2 : index
    %c0_25 = arith.constant 0 : index
    %c0_26 = arith.constant 0 : index
    %33 = vector.load %arg5[%c2_24, %c0_25, %c0_26] : memref<3x1x64xf32, #tpu.memory_space<vmem>>, vector<1x1x64xf32>
    %34 = vector.shape_cast %33 : vector<1x1x64xf32> to vector<1x64xf32>
    %35 = vector.broadcast %34 : vector<1x64xf32> to vector<16x64xf32>
    %36 = arith.addf %32, %35 : vector<16x64xf32>
    %cst_27 = arith.constant 0.000000e+00 : f32
    %37 = vector.broadcast %cst_27 : f32 to vector<16x64xf32>
    %38 = arith.maximumf %36, %37 : vector<16x64xf32>
    %39 = arith.truncf %38 : vector<16x64xf32> to vector<16x64xbf16>
    %c0_28 = arith.constant 0 : index
    %c0_29 = arith.constant 0 : index
    %40 = vector.load %arg6[%c0_28, %c0_29] : memref<64x100xbf16, #tpu.memory_space<vmem>>, vector<64x100xbf16>
    %cst_30 = arith.constant dense<0.000000e+00> : vector<16x100xf32>
    %41 = tpu.matmul %39, %40, %cst_30 {dimension_numbers = #tpu.dot_dimension_numbers<[1], [0], [0], [1], [0, 0, 1, 1], [], []>} : vector<16x64xbf16>, vector<64x100xbf16>, vector<16x100xf32> -> vector<16x100xf32>
    %c0_31 = arith.constant 0 : index
    %c0_32 = arith.constant 0 : index
    %42 = vector.load %arg7[%c0_31, %c0_32] : memref<1x100xf32, #tpu.memory_space<vmem>>, vector<1x100xf32>
    %43 = vector.broadcast %42 : vector<1x100xf32> to vector<16x100xf32>
    %44 = arith.addf %41, %43 : vector<16x100xf32>
    %c0_33 = arith.constant 0 : index
    %c0_34 = arith.constant 0 : index
    %45 = vector.load %arg8[%c0_33, %c0_34] : memref<16x100xf32, #tpu.memory_space<vmem>>, vector<16x100xf32>
    tpu.vector_store %arg8[%c0_33, %c0_34], %44 {strides = array<i32>} : memref<16x100xf32, #tpu.memory_space<vmem>>, vector<16x100xf32>,
    return
  }
  func.func @transform_0(%arg0: i32) -> (i32, i32) {
    %c0_i32 = arith.constant 0 : i32
    %c0_i32_0 = arith.constant 0 : i32
    return %arg0, %c0_i32 : i32, i32
  }
  func.func @transform_1(%arg0: i32) -> (i32, i32) {
    %c0_i32 = arith.constant 0 : i32
    %c0_i32_0 = arith.constant 0 : i32
    %c0_i32_1 = arith.constant 0 : i32
    return %c0_i32, %c0_i32_0 : i32, i32
  }
  func.func @transform_2(%arg0: i32) -> (i32, i32) {
    %c0_i32 = arith.constant 0 : i32
    %c0_i32_0 = arith.constant 0 : i32
    %c0_i32_1 = arith.constant 0 : i32
    return %c0_i32, %c0_i32_0 : i32, i32
  }
  func.func @transform_3(%arg0: i32) -> (i32, i32, i32) {
    %c0_i32 = arith.constant 0 : i32
    %c0_i32_0 = arith.constant 0 : i32
    %c0_i32_1 = arith.constant 0 : i32
    %c0_i32_2 = arith.constant 0 : i32
    return %c0_i32, %c0_i32_0, %c0_i32_1 : i32, i32, i32
  }
  func.func @transform_4(%arg0: i32) -> (i32, i32, i32) {
    %c0_i32 = arith.constant 0 : i32
    %c0_i32_0 = arith.constant 0 : i32
    %c0_i32_1 = arith.constant 0 : i32
    %c0_i32_2 = arith.constant 0 : i32
    return %c0_i32, %c0_i32_0, %c0_i32_1 : i32, i32, i32
  }
  func.func @transform_5(%arg0: i32) -> (i32, i32) {
    %c0_i32 = arith.constant 0 : i32
    %c0_i32_0 = arith.constant 0 : i32
    %c0_i32_1 = arith.constant 0 : i32
    return %c0_i32, %c0_i32_0 : i32, i32
  }
  func.func @transform_6(%arg0: i32) -> (i32, i32) {
    %c0_i32 = arith.constant 0 : i32
    %c0_i32_0 = arith.constant 0 : i32
    %c0_i32_1 = arith.constant 0 : i32
    return %c0_i32, %c0_i32_0 : i32, i32
  }
  func.func @transform_7(%arg0: i32) -> (i32, i32) {
    %c0_i32 = arith.constant 0 : i32
    %c0_i32_0 = arith.constant 0 : i32
    return %arg0, %c0_i32 : i32, i32
  }
}

</mosaic_0001>

<llo_original>
// kernel: tpu_custom_call.1
$region0: #{tpu_custom_call.1}
  #allocation0 [shape = 'u32[]', space=smem, size = 0x4, offset = 0x4, fixed_abs, tag = 'smem constant byte address 0x4 - core index']
  #allocation1 [shape = 'u32[72,128]{1,0:T(1,128)}', space=vmem, size = 0x9000, scoped, tag = 'internal scratch']
  %s0 = inlined_call_operand.vmem [shape: f32[16,100], index: 0, kind: input, shape index: {}]
  %s1 = inlined_call_operand.vmem [shape: bf16[100,64], index: 1, kind: input, shape index: {}]
  %s2 = inlined_call_operand.vmem [shape: f32[1,64], index: 2, kind: input, shape index: {}]
  %s3 = inlined_call_operand.hbm [shape: bf16[3,64,64], index: 3, kind: input, shape index: {}]
  %s4 = inlined_call_operand.vmem [shape: f32[3,1,64], index: 4, kind: input, shape index: {}]
  %s5 = inlined_call_operand.vmem [shape: bf16[64,100], index: 5, kind: input, shape index: {}]
  %s6 = inlined_call_operand.vmem [shape: f32[1,100], index: 6, kind: input, shape index: {}]
  %s7 = inlined_call_operand.hbm [shape: f32[16,100], index: 7, kind: output, shape index: {}]
  %s8 = sld [smem:[#allocation0]]
  $region42: #{tpu_custom_call.1} parent=0
    _
  %s10 = ssub.s32 1, %s8
  %s11 = scalar_select 0, %s10, %s8
  $region1: #{tpu_custom_call.1} parent=0
    #allocation2 [shape = 'u8[49152]{0}', space=vmem, size = 0xc000, scoped, tag = 'input window, operand 3, single buffered']
    #allocation3 [shape = 's32[1]{0}', space=sflag, size = 0x4, scoped, tag = 'scoped memory for tpu_custom_call.1']
    #allocation4 [shape = 's32[1]{0}', space=sflag, size = 0x4, scoped, tag = 'scoped memory for tpu_custom_call.1']
    #allocation5 [shape = 'u8[8192]{0}', space=vmem, size = 0x2000, scoped, tag = 'output window, operand 0, single buffered']
    %12 = vsyncpa [#allocation3], 0
    %13 = vsyncpa [#allocation4], 0
    // Predicated region
    $region2: #{tpu_custom_call.1} parent=1 // pred_check
      _
    $region3: #{tpu_custom_call.1} parent=1 // pred_check_branch
      %15 = sbr.rel (0) target = $region5
    $region4: #{tpu_custom_call.1} parent=1 // pred_region
      _
    $region5: #{tpu_custom_call.1} parent=1 // pred_fallthru
      _
    // Predicated region
    $region6: #{tpu_custom_call.1} parent=1 // pred_check
      _
    $region7: #{tpu_custom_call.1} parent=1 // pred_check_branch
      %17 = sbr.rel (0) target = $region9
    $region8: #{tpu_custom_call.1} parent=1 // pred_region
      _
    $region9: #{tpu_custom_call.1} parent=1 // pred_fallthru
      _
    // Predicated region
    $region10: #{tpu_custom_call.1} parent=1 // pred_check
      _
    $region11: #{tpu_custom_call.1} parent=1 // pred_check_branch
      %19 = sbr.rel (0) target = $region13
    $region12: #{tpu_custom_call.1} parent=1 // pred_region
      _
    $region13: #{tpu_custom_call.1} parent=1 // pred_fallthru
      _
    // Predicated region
    $region14: #{tpu_custom_call.1} parent=1 // pred_check
      _
    $region15: #{tpu_custom_call.1} parent=1 // pred_check_branch
      %21 = sbr.rel (0) target = $region17
    $region16: #{tpu_custom_call.1} parent=1 // pred_region
      %23 = vsyncadd [#allocation3], 0
      %s24 = sshll.u32 %s3, 4
      %s25 = int_to_ptr.hbm [resolvable:$true] %s24
      %s26 = sshll.u32 [#allocation2], 4
      %s27 = int_to_ptr.vmem [resolvable:$true] %s26
      %32 = dma.hbm_to_vmem [thread:$0]  %s25, 1536, %s27, [#allocation3], 64, 64, 4
    $region17: #{tpu_custom_call.1} parent=1 // pred_fallthru
      _
    // Predicated region
    $region18: #{tpu_custom_call.1} parent=1 // pred_check
      _
    $region19: #{tpu_custom_call.1} parent=1 // pred_check_branch
      %34 = sbr.rel (0) target = $region21
    $region20: #{tpu_custom_call.1} parent=1 // pred_region
      _
    $region21: #{tpu_custom_call.1} parent=1 // pred_fallthru
      _
    // Predicated region
    $region22: #{tpu_custom_call.1} parent=1 // pred_check
      _
    $region23: #{tpu_custom_call.1} parent=1 // pred_check_branch
      %36 = sbr.rel (0) target = $region25
    $region24: #{tpu_custom_call.1} parent=1 // pred_region
      _
    $region25: #{tpu_custom_call.1} parent=1 // pred_fallthru
      _
    // Predicated region
    $region26: #{tpu_custom_call.1} parent=1 // pred_check
      _
    $region27: #{tpu_custom_call.1} parent=1 // pred_check_branch
      %38 = sbr.rel (0) target = $region29
    $region28: #{tpu_custom_call.1} parent=1 // pred_region
      _
    $region29: #{tpu_custom_call.1} parent=1 // pred_fallthru
      _
    // Predicated region
    $region30: #{tpu_custom_call.1} parent=1 // pred_check
      _
    $region31: #{tpu_custom_call.1} parent=1 // pred_check_branch
      %40 = sbr.rel (0) target = $region33
    $region32: #{tpu_custom_call.1} parent=1 // pred_region
      %42 = dma.done [#allocation3], 1536
    $region33: #{tpu_custom_call.1} parent=1 // pred_fallthru
      _
    %v44 = vld [vmem:[%s0] sm:$0xff]
    %v45 = vld [vmem:[%s0 + $0x8] sm:$0xff]
    %v46 = vpack.c.bf16 %v45, %v44
    %v47 = vld [vmem:[%s1] sm:$0xf]
    %v48 = vld [vmem:[%s1 + $0x4] sm:$0xf]
    %v49 = vld [vmem:[%s1 + $0x8] sm:$0xf]
    %v50 = vld [vmem:[%s1 + $0xc] sm:$0xf]
    %v51 = vld [vmem:[%s1 + $0x10] sm:$0xf]
    %v52 = vld [vmem:[%s1 + $0x14] sm:$0xf]
    %v53 = vld [vmem:[%s1 + $0x18] sm:$0xf]
    %v54 = vld [vmem:[%s1 + $0x1c] sm:$0xf]
    %v55 = vld [vmem:[%s1 + $0x20] sm:$0xf]
    %v56 = vld [vmem:[%s1 + $0x24] sm:$0xf]
    %v57 = vld [vmem:[%s1 + $0x28] sm:$0xf]
    %v58 = vld [vmem:[%s1 + $0x2c] sm:$0xf]
    %v59 = vld [vmem:[%s1 + $0x30] sm:$0x3]
    %v60 = vld [vmem:[%s2] sm:$0x1]
    %v62 = vperm.slane %v60, 0
    %v77 = vunpack.c.l.b16 %v47
    %v78 = vunpack.c.l.b16 %v48
    %v79 = vunpack.c.l.b16 %v49
    %v80 = vunpack.c.l.b16 %v50
    %v81 = vunpack.c.l.b16 %v51
    %v82 = vunpack.c.l.b16 %v52
    %v83 = vunpack.c.l.b16 %v53
    %v84 = vunpack.c.l.b16 %v54
    %v85 = vunpack.c.l.b16 %v55
    %v86 = vunpack.c.l.b16 %v56
    %v87 = vunpack.c.l.b16 %v57
    %v88 = vunpack.c.l.b16 %v58
    %v89 = vunpack.c.l.b16 %v59
    %v90 = vpack.c.b16 %v78, %v77
    %v91 = vpack.c.b16 %v80, %v79
    %v92 = vpack.c.b16 %v82, %v81
    %v93 = vpack.c.b16 %v84, %v83
    %v94 = vpack.c.b16 %v86, %v85
    %v95 = vpack.c.b16 %v88, %v87
    %v96 = vpack.c.b16 %v89, %v89
    %vm103 = vcmask 818176
    %v105 = vsel %vm103, %v46, 0
    %vm107 = vcmask 1041408
    %v109 = vsel %vm107, %v96, 0
    %111 = vmatpush.bf16.msra.mxu0 0
    %112 = vmatpush.bf16.msra.mxu0 %v109
    %113 = vmatpush.bf16.msra.mxu0 %v95
    %114 = vmatpush.bf16.msra.mxu0 %v94
    %115 = vmatpush.bf16.msra.mxu0 %v93
    %116 = vmatpush.bf16.msra.mxu0 %v92
    %117 = vmatpush.bf16.msra.mxu0 %v91
    %118 = vmatpush.bf16.msra.mxu0 %v90
    %119 = vmatmul.bf16.gmra.mxu0 %v105
    %v120 = vpop.f32.mrf.mxu0
    %v121 = vadd.f32 %v62, %v120
    %v122 = vpop.f32.mrf.mxu0
    %v123 = vadd.f32 %v62, %v122
    %124 = vdwg.mxu0
    %v125 = vmax.f32 %v121, 0.0
    %v126 = vmax.f32 %v123, 0.0
    %v127 = vpack.c.bf16 %v126, %v125
    %v128 = vld [vmem:[#allocation2] sm:$0xf]
    %v129 = vld [vmem:[#allocation2 + $0x4] sm:$0xf]
    %v130 = vld [vmem:[#allocation2 + $0x8] sm:$0xf]
    %v131 = vld [vmem:[#allocation2 + $0xc] sm:$0xf]
    %v132 = vld [vmem:[#allocation2 + $0x10] sm:$0xf]
    %v133 = vld [vmem:[#allocation2 + $0x14] sm:$0xf]
    %v134 = vld [vmem:[#allocation2 + $0x18] sm:$0xf]
    %v135 = vld [vmem:[#allocation2 + $0x1c] sm:$0xf]
    %v136 = vld [vmem:[%s4] sm:$0x1]
    %v138 = vperm.slane %v136, 0
    %v148 = vunpack.c.l.b16 %v128
    %v149 = vunpack.c.l.b16 %v129
    %v150 = vunpack.c.l.b16 %v130
    %v151 = vunpack.c.l.b16 %v131
    %v152 = vunpack.c.l.b16 %v132
    %v153 = vunpack.c.l.b16 %v133
    %v154 = vunpack.c.l.b16 %v134
    %v155 = vunpack.c.l.b16 %v135
    %v156 = vpack.c.b16 %v149, %v148
    %v157 = vpack.c.b16 %v151, %v150
    %v158 = vpack.c.b16 %v153, %v152
    %v159 = vpack.c.b16 %v155, %v154
    %vm164 = vcmask 523264
    %v166 = vsel %vm164, %v127, 0
    %168 = vmatpush.bf16.msra.mxu0 0
    %169 = vmatpush.bf16.msra.mxu0 0
    %170 = vmatpush.bf16.msra.mxu0 0
    %171 = vmatpush.bf16.msra.mxu0 0
    %172 = vmatpush.bf16.msra.mxu0 %v159
    %173 = vmatpush.bf16.msra.mxu0 %v158
    %174 = vmatpush.bf16.msra.mxu0 %v157
    %175 = vmatpush.bf16.msra.mxu0 %v156
    %176 = vmatmul.bf16.gmra.mxu0 %v166
    %v177 = vpop.f32.mrf.mxu0
    %v178 = vadd.f32 %v138, %v177
    %v179 = vpop.f32.mrf.mxu0
    %v180 = vadd.f32 %v138, %v179
    %181 = vdwg.mxu0
    %v182 = vmax.f32 %v178, 0.0
    %v183 = vmax.f32 %v180, 0.0
    %v184 = vpack.c.bf16 %v183, %v182
    %s185 = scalar_lea.vmem [#allocation2], 32
    %v186 = vld [vmem:[%s185] sm:$0xf]
    %v187 = vld [vmem:[%s185 + $0x4] sm:$0xf]
    %v188 = vld [vmem:[%s185 + $0x8] sm:$0xf]
    %v189 = vld [vmem:[%s185 + $0xc] sm:$0xf]
    %v190 = vld [vmem:[%s185 + $0x10] sm:$0xf]
    %v191 = vld [vmem:[%s185 + $0x14] sm:$0xf]
    %v192 = vld [vmem:[%s185 + $0x18] sm:$0xf]
    %v193 = vld [vmem:[%s185 + $0x1c] sm:$0xf]
    %s194 = scalar_lea.vmem %s4, 1
    %v195 = vld [vmem:[%s194] sm:$0x1]
    %v197 = vperm.slane %v195, 0
    %v207 = vunpack.c.l.b16 %v186
    %v208 = vunpack.c.l.b16 %v187
    %v209 = vunpack.c.l.b16 %v188
    %v210 = vunpack.c.l.b16 %v189
    %v211 = vunpack.c.l.b16 %v190
    %v212 = vunpack.c.l.b16 %v191
    %v213 = vunpack.c.l.b16 %v192
    %v214 = vunpack.c.l.b16 %v193
    %v215 = vpack.c.b16 %v208, %v207
    %v216 = vpack.c.b16 %v210, %v209
    %v217 = vpack.c.b16 %v212, %v211
    %v218 = vpack.c.b16 %v214, %v213
    %v224 = vsel %vm164, %v184, 0
    %226 = vmatpush.bf16.msra.mxu0 0
    %227 = vmatpush.bf16.msra.mxu0 0
    %228 = vmatpush.bf16.msra.mxu0 0
    %229 = vmatpush.bf16.msra.mxu0 0
    %230 = vmatpush.bf16.msra.mxu0 %v218
    %231 = vmatpush.bf16.msra.mxu0 %v217
    %232 = vmatpush.bf16.msra.mxu0 %v216
    %233 = vmatpush.bf16.msra.mxu0 %v215
    %234 = vmatmul.bf16.gmra.mxu0 %v224
    %v235 = vpop.f32.mrf.mxu0
    %v236 = vadd.f32 %v197, %v235
    %v237 = vpop.f32.mrf.mxu0
    %v238 = vadd.f32 %v197, %v237
    %239 = vdwg.mxu0
    %v240 = vmax.f32 %v236, 0.0
    %v241 = vmax.f32 %v238, 0.0
    %v242 = vpack.c.bf16 %v241, %v240
    %s243 = scalar_lea.vmem [#allocation2], 64
    %v244 = vld [vmem:[%s243] sm:$0xf]
    %v245 = vld [vmem:[%s243 + $0x4] sm:$0xf]
    %v246 = vld [vmem:[%s243 + $0x8] sm:$0xf]
    %v247 = vld [vmem:[%s243 + $0xc] sm:$0xf]
    %v248 = vld [vmem:[%s243 + $0x10] sm:$0xf]
    %v249 = vld [vmem:[%s243 + $0x14] sm:$0xf]
    %v250 = vld [vmem:[%s243 + $0x18] sm:$0xf]
    %v251 = vld [vmem:[%s243 + $0x1c] sm:$0xf]
    %s252 = scalar_lea.vmem %s4, 2
    %v253 = vld [vmem:[%s252] sm:$0x1]
    %v255 = vperm.slane %v253, 0
    %v265 = vunpack.c.l.b16 %v244
    %v266 = vunpack.c.l.b16 %v245
    %v267 = vunpack.c.l.b16 %v246
    %v268 = vunpack.c.l.b16 %v247
    %v269 = vunpack.c.l.b16 %v248
    %v270 = vunpack.c.l.b16 %v249
    %v271 = vunpack.c.l.b16 %v250
    %v272 = vunpack.c.l.b16 %v251
    %v273 = vpack.c.b16 %v266, %v265
    %v274 = vpack.c.b16 %v268, %v267
    %v275 = vpack.c.b16 %v270, %v269
    %v276 = vpack.c.b16 %v272, %v271
    %v282 = vsel %vm164, %v242, 0
    %284 = vmatpush.bf16.msra.mxu0 0
    %285 = vmatpush.bf16.msra.mxu0 0
    %286 = vmatpush.bf16.msra.mxu0 0
    %287 = vmatpush.bf16.msra.mxu0 0
    %288 = vmatpush.bf16.msra.mxu0 %v276
    %289 = vmatpush.bf16.msra.mxu0 %v275
    %290 = vmatpush.bf16.msra.mxu0 %v274
    %291 = vmatpush.bf16.msra.mxu0 %v273
    %292 = vmatmul.bf16.gmra.mxu0 %v282
    %v293 = vpop.f32.mrf.mxu0
    %v294 = vadd.f32 %v255, %v293
    %v295 = vpop.f32.mrf.mxu0
    %v296 = vadd.f32 %v255, %v295
    %297 = vdwg.mxu0
    %v298 = vmax.f32 %v294, 0.0
    %v299 = vmax.f32 %v296, 0.0
    %v300 = vpack.c.bf16 %v299, %v298
    %v301 = vld [vmem:[%s5] sm:$0xf]
    %v302 = vld [vmem:[%s5 + $0x4] sm:$0xf]
    %v303 = vld [vmem:[%s5 + $0x8] sm:$0xf]
    %v304 = vld [vmem:[%s5 + $0xc] sm:$0xf]
    %v305 = vld [vmem:[%s5 + $0x10] sm:$0xf]
    %v306 = vld [vmem:[%s5 + $0x14] sm:$0xf]
    %v307 = vld [vmem:[%s5 + $0x18] sm:$0xf]
    %v308 = vld [vmem:[%s5 + $0x1c] sm:$0xf]
    %v309 = vld [vmem:[%s6] sm:$0x1]
    %v311 = vperm.slane %v309, 0
    %v321 = vunpack.c.l.b16 %v301
    %v322 = vunpack.c.l.b16 %v302
    %v323 = vunpack.c.l.b16 %v303
    %v324 = vunpack.c.l.b16 %v304
    %v325 = vunpack.c.l.b16 %v305
    %v326 = vunpack.c.l.b16 %v306
    %v327 = vunpack.c.l.b16 %v307
    %v328 = vunpack.c.l.b16 %v308
    %v329 = vpack.c.b16 %v322, %v321
    %v330 = vpack.c.b16 %v324, %v323
    %v331 = vpack.c.b16 %v326, %v325
    %v332 = vpack.c.b16 %v328, %v327
    %v338 = vsel %vm164, %v300, 0
    %340 = vmatpush.bf16.msra.mxu0 0
    %341 = vmatpush.bf16.msra.mxu0 0
    %342 = vmatpush.bf16.msra.mxu0 0
    %343 = vmatpush.bf16.msra.mxu0 0
    %344 = vmatpush.bf16.msra.mxu0 %v332
    %345 = vmatpush.bf16.msra.mxu0 %v331
    %346 = vmatpush.bf16.msra.mxu0 %v330
    %347 = vmatpush.bf16.msra.mxu0 %v329
    %348 = vmatmul.bf16.gmra.mxu0 %v338
    %v349 = vpop.f32.mrf.mxu0
    %v350 = vadd.f32 %v311, %v349
    %v351 = vpop.f32.mrf.mxu0
    %v352 = vadd.f32 %v311, %v351
    %353 = vdwg.mxu0
    %354 = vst.msk [vmem:[#allocation5] sm:$0xff] %vm103, %v350
    %355 = vst.msk [vmem:[#allocation5 + $0x8] sm:$0xff] %vm103, %v352
    // Predicated region
    $region34: #{tpu_custom_call.1} parent=1 // pred_check
      _
    $region35: #{tpu_custom_call.1} parent=1 // pred_check_branch
      %357 = sbr.rel (0) target = $region37
    $region36: #{tpu_custom_call.1} parent=1 // pred_region
      %359 = vsyncadd [#allocation4], 0
      %s360 = sshll.u32 [#allocation5], 4
      %s361 = int_to_ptr.vmem [resolvable:$true] %s360
      %s362 = sshll.u32 %s7, 4
      %s363 = int_to_ptr.hbm [resolvable:$true] %s362
      %368 = dma.vmem_to_hbm [thread:$0]  %s361, 256, %s363, [#allocation4], 128, 128, 8
    $region37: #{tpu_custom_call.1} parent=1 // pred_fallthru
      _
    // Predicated region
    $region38: #{tpu_custom_call.1} parent=1 // pred_check
      _
    $region39: #{tpu_custom_call.1} parent=1 // pred_check_branch
      %370 = sbr.rel (0) target = $region41
    $region40: #{tpu_custom_call.1} parent=1 // pred_region
      %372 = dma.done [#allocation4], 256
    $region41: #{tpu_custom_call.1} parent=1 // pred_fallthru
      _
    %373 = vsyncpa [#allocation3], 1
    %374 = vsyncpa [#allocation4], 1

</llo_original>
